<compile_context>
chip_gen: v7x
topology: tpu7x:2x2x1
jax: 0.10.0
libtpu: 0.0.40
codegen_flags: <defaults>
</compile_context>

<pallas_src>
import jax
import jax.numpy as jnp
from jax.experimental import pallas as pl
from jax.experimental.pallas import tpu as pltpu

NEURONS_U = 15  # hidden width from the PyTorch module
IN_DIM = 3
OUT_DIM = 2


def netu_kernel(x_ref,
                w1_ref, b1_ref,
                w2_ref, b2_ref,
                w3_ref, b3_ref,
                w4t_ref, b4_ref,
                o_ref):
    """One batch tile. Activations are (features, TB): batch on the lane axis."""
    x = x_ref[...]                       # (3, TB)
    w1 = w1_ref[...]                     # (15, 3)

    # Layer 1 (K=3): three broadcast FMAs on the VPU instead of a padded MXU dot.
    h = (b1_ref[...]                     # (15, 1) -> broadcast over lanes
         + w1[:, 0:1] * x[0:1, :]
         + w1[:, 1:2] * x[1:2, :]
         + w1[:, 2:3] * x[2:3, :])       # (15, TB)
    h = jnp.tanh(h)

    # Layers 2/3 (15x15): MXU matmuls, lane-dense along the batch axis.
    h = jnp.tanh(jnp.dot(w2_ref[...], h, preferred_element_type=jnp.float32)
                 + b2_ref[...])          # (15, TB)
    h = jnp.tanh(jnp.dot(w3_ref[...], h, preferred_element_type=jnp.float32)
                 + b3_ref[...])          # (15, TB)

    # Layer 4 (N=2): two multiply + sublane-reduce rows (VPU + XLU), skip MXU.
    w4t = w4t_ref[...]                   # (15, 2)
    y0 = jnp.sum(w4t[:, 0:1] * h, axis=0, keepdims=True)   # (1, TB)
    y1 = jnp.sum(w4t[:, 1:2] * h, axis=0, keepdims=True)   # (1, TB)
    y = jnp.concatenate([y0, y1], axis=0) + b4_ref[...]    # (2, TB)
    o_ref[...] = y.astype(o_ref.dtype)


def _round_up(n, m):
    return ((n + m - 1) // m) * m


def netu_forward(x, params, *, tb=16384):
    """x: (B, 3) float32 -> (B, 2) float32 (same contract as the PyTorch module).

    params: PyTorch-style weights w{i} of shape (out, in), biases b{i} of (out,).
    """
    B = x.shape[0]
    # Batch tile: multiple of 128 lanes; clamp so tiny batches use one tile.
    # Default 16k columns is ~0.2 MiB per x buffer -> fits every generation
    # (v5e/v6e 128 MiB, v7x 64 MiB VMEM) with double buffering to spare.
    tb = max(128, min(tb, _round_up(B, 128)))
    b_pad = _round_up(B, tb)
    grid = (b_pad // tb,)

    # (features, batch) layout: batch -> lanes, features -> sublanes.
    x_t = jnp.pad(x.astype(jnp.float32).T, ((0, 0), (0, b_pad - B)))

    args = (
        x_t,
        params["w1"], params["b1"].reshape(NEURONS_U, 1),
        params["w2"], params["b2"].reshape(NEURONS_U, 1),
        params["w3"], params["b3"].reshape(NEURONS_U, 1),
        params["w4"].T, params["b4"].reshape(OUT_DIM, 1),
    )

    def const(i):          # weights/biases: same block every step (VMEM-resident)
        return (0, 0)

    in_specs = [
        pl.BlockSpec((IN_DIM, tb), lambda i: (0, i)),       # x tile
        pl.BlockSpec((NEURONS_U, IN_DIM), const),           # w1 (15, 3)
        pl.BlockSpec((NEURONS_U, 1), const),                # b1
        pl.BlockSpec((NEURONS_U, NEURONS_U), const),        # w2 (15, 15)
        pl.BlockSpec((NEURONS_U, 1), const),                # b2
        pl.BlockSpec((NEURONS_U, NEURONS_U), const),        # w3 (15, 15)
        pl.BlockSpec((NEURONS_U, 1), const),                # b3
        pl.BlockSpec((NEURONS_U, OUT_DIM), const),          # w4^T (15, 2)
        pl.BlockSpec((OUT_DIM, 1), const),                  # b4
    ]
    out_spec = pl.BlockSpec((OUT_DIM, tb), lambda i: (0, i))

    y_t = pl.pallas_call(
        netu_kernel,
        out_shape=jax.ShapeDtypeStruct((OUT_DIM, b_pad), jnp.float32),
        grid=grid,
        in_specs=in_specs,
        out_specs=out_spec,
        compiler_params=pltpu.CompilerParams(
            dimension_semantics=("parallel",)),
    )(*args)

    return y_t[:, :B].T


def init_params(key):
    """PyTorch-style init: W (out, in), b (out,), U(-1/sqrt(fan_in), +1/sqrt(fan_in))."""
    dims = [(IN_DIM, NEURONS_U),
            (NEURONS_U, NEURONS_U),
            (NEURONS_U, NEURONS_U),
            (NEURONS_U, OUT_DIM)]
    params = {}
    keys = jax.random.split(key, 2 * len(dims))
    for i, (fan_in, fan_out) in enumerate(dims):
        bound = 1.0 / (fan_in ** 0.5)
        params[f"w{i + 1}"] = jax.random.uniform(
            keys[2 * i], (fan_out, fan_in),
            minval=-bound, maxval=bound, dtype=jnp.float32)
        params[f"b{i + 1}"] = jax.random.uniform(
            keys[2 * i + 1], (fan_out,),
            minval=-bound, maxval=bound, dtype=jnp.float32)
    return params


def netu_reference(x, params):
    """Pure-JAX reference (f32-accurate dots) of the same forward pass."""
    def dot(a, b):
        return jnp.dot(a, b, precision=jax.lax.Precision.HIGHEST)
    h = jnp.tanh(dot(x, params["w1"].T) + params["b1"])
    h = jnp.tanh(dot(h, params["w2"].T) + params["b2"])
    h = jnp.tanh(dot(h, params["w3"].T) + params["b3"])
    return dot(h, params["w4"].T) + params["b4"]


if __name__ == "__main__":
    key = jax.random.PRNGKey(0)
    pkey, xkey1, xkey2 = jax.random.split(key, 3)
    params = init_params(pkey)

    # Small batch of 3-D inputs (e.g. (x, y, parameter) points of the PINN).
    B1 = 16
    x1 = jax.random.uniform(xkey1, (B1, IN_DIM), dtype=jnp.float32)
    out1 = jax.block_until_ready(netu_forward(x1, params))
    ref1 = netu_reference(x1, params)
    assert out1.shape == (B1, OUT_DIM), out1.shape
    assert jnp.allclose(out1, ref1, atol=1e-4, rtol=1e-4), "mismatch vs reference (B=16)"

    # Larger, non-tile-multiple batch to exercise the padded, multi-tile grid path.
    B2 = 1000
    x2 = jax.random.uniform(xkey2, (B2, IN_DIM), dtype=jnp.float32)
    out2 = jax.block_until_ready(netu_forward(x2, params, tb=512))
    ref2 = netu_reference(x2, params)
    assert out2.shape == (B2, OUT_DIM), out2.shape
    assert jnp.allclose(out2, ref2, atol=1e-4, rtol=1e-4), "mismatch vs reference (B=1000)"

    print("KERNEL_OK")
</pallas_src>

<mosaic_0001>
module attributes {stable_mosaic.version = 11 : i64} {
  func.func @netu_kernel(%arg0: i32, %arg1: memref<3x128xf32, #tpu.memory_space<vmem>>, %arg2: memref<15x3xf32, #tpu.memory_space<vmem>>, %arg3: memref<15x1xf32, #tpu.memory_space<vmem>>, %arg4: memref<15x15xf32, #tpu.memory_space<vmem>>, %arg5: memref<15x1xf32, #tpu.memory_space<vmem>>, %arg6: memref<15x15xf32, #tpu.memory_space<vmem>>, %arg7: memref<15x1xf32, #tpu.memory_space<vmem>>, %arg8: memref<15x2xf32, #tpu.memory_space<vmem>>, %arg9: memref<2x1xf32, #tpu.memory_space<vmem>>, %arg10: memref<2x128xf32, #tpu.memory_space<vmem>>) attributes {dimension_semantics = [#tpu.dimension_semantics<parallel>], iteration_bounds = array<i64: 1>, scalar_prefetch = 0 : i64, scratch_operands = 0 : i64, tpu.core_type = #tpu.core_type<tc>, window_params = [{transform_indices = @transform_0, window_bounds = array<i64: 3, 128>}, {pipeline_mode = #tpu.pipeline_mode<synchronous>, transform_indices = @transform_1, window_bounds = array<i64: 15, 3>}, {pipeline_mode = #tpu.pipeline_mode<synchronous>, transform_indices = @transform_2, window_bounds = array<i64: 15, 1>}, {pipeline_mode = #tpu.pipeline_mode<synchronous>, transform_indices = @transform_3, window_bounds = array<i64: 15, 15>}, {pipeline_mode = #tpu.pipeline_mode<synchronous>, transform_indices = @transform_4, window_bounds = array<i64: 15, 1>}, {pipeline_mode = #tpu.pipeline_mode<synchronous>, transform_indices = @transform_5, window_bounds = array<i64: 15, 15>}, {pipeline_mode = #tpu.pipeline_mode<synchronous>, transform_indices = @transform_6, window_bounds = array<i64: 15, 1>}, {pipeline_mode = #tpu.pipeline_mode<synchronous>, transform_indices = @transform_7, window_bounds = array<i64: 15, 2>}, {pipeline_mode = #tpu.pipeline_mode<synchronous>, transform_indices = @transform_8, window_bounds = array<i64: 2, 1>}, {transform_indices = @transform_9, window_bounds = array<i64: 2, 128>}]} {
    %c0 = arith.constant 0 : index
    %c0_0 = arith.constant 0 : index
    %0 = vector.load %arg1[%c0, %c0_0] : memref<3x128xf32, #tpu.memory_space<vmem>>, vector<3x128xf32>
    %c0_1 = arith.constant 0 : index
    %c0_2 = arith.constant 0 : index
    %1 = vector.load %arg2[%c0_1, %c0_2] : memref<15x3xf32, #tpu.memory_space<vmem>>, vector<15x3xf32>
    %c0_3 = arith.constant 0 : index
    %c0_4 = arith.constant 0 : index
    %2 = vector.load %arg3[%c0_3, %c0_4] : memref<15x1xf32, #tpu.memory_space<vmem>>, vector<15x1xf32>
    %3 = vector.extract_strided_slice %1 {offsets = [0, 0], sizes = [15, 1], strides = [1, 1]} : vector<15x3xf32> to vector<15x1xf32>
    %4 = vector.extract_strided_slice %0 {offsets = [0, 0], sizes = [1, 128], strides = [1, 1]} : vector<3x128xf32> to vector<1x128xf32>
    %5 = vector.broadcast %3 : vector<15x1xf32> to vector<15x128xf32>
    %6 = vector.broadcast %4 : vector<1x128xf32> to vector<15x128xf32>
    %7 = arith.mulf %5, %6 : vector<15x128xf32>
    %8 = vector.broadcast %2 : vector<15x1xf32> to vector<15x128xf32>
    %9 = arith.addf %8, %7 : vector<15x128xf32>
    %10 = vector.extract_strided_slice %1 {offsets = [0, 1], sizes = [15, 1], strides = [1, 1]} : vector<15x3xf32> to vector<15x1xf32>
    %11 = vector.extract_strided_slice %0 {offsets = [1, 0], sizes = [1, 128], strides = [1, 1]} : vector<3x128xf32> to vector<1x128xf32>
    %12 = vector.broadcast %10 : vector<15x1xf32> to vector<15x128xf32>
    %13 = vector.broadcast %11 : vector<1x128xf32> to vector<15x128xf32>
    %14 = arith.mulf %12, %13 : vector<15x128xf32>
    %15 = arith.addf %9, %14 : vector<15x128xf32>
    %16 = vector.extract_strided_slice %1 {offsets = [0, 2], sizes = [15, 1], strides = [1, 1]} : vector<15x3xf32> to vector<15x1xf32>
    %17 = vector.extract_strided_slice %0 {offsets = [2, 0], sizes = [1, 128], strides = [1, 1]} : vector<3x128xf32> to vector<1x128xf32>
    %18 = vector.broadcast %16 : vector<15x1xf32> to vector<15x128xf32>
    %19 = vector.broadcast %17 : vector<1x128xf32> to vector<15x128xf32>
    %20 = arith.mulf %18, %19 : vector<15x128xf32>
    %21 = arith.addf %15, %20 : vector<15x128xf32>
    %22 = math.tanh %21 : vector<15x128xf32>
    %c0_5 = arith.constant 0 : index
    %c0_6 = arith.constant 0 : index
    %23 = vector.load %arg4[%c0_5, %c0_6] : memref<15x15xf32, #tpu.memory_space<vmem>>, vector<15x15xf32>
    %cst = arith.constant dense<0.000000e+00> : vector<15x128xf32>
    %24 = tpu.matmul %23, %22, %cst {dimension_numbers = #tpu.dot_dimension_numbers<[1], [0], [0], [1], [0, 0, 1, 1], [], []>} : vector<15x15xf32>, vector<15x128xf32>, vector<15x128xf32> -> vector<15x128xf32>
    %c0_7 = arith.constant 0 : index
    %c0_8 = arith.constant 0 : index
    %25 = vector.load %arg5[%c0_7, %c0_8] : memref<15x1xf32, #tpu.memory_space<vmem>>, vector<15x1xf32>
    %26 = vector.broadcast %25 : vector<15x1xf32> to vector<15x128xf32>
    %27 = arith.addf %24, %26 : vector<15x128xf32>
    %28 = math.tanh %27 : vector<15x128xf32>
    %c0_9 = arith.constant 0 : index
    %c0_10 = arith.constant 0 : index
    %29 = vector.load %arg6[%c0_9, %c0_10] : memref<15x15xf32, #tpu.memory_space<vmem>>, vector<15x15xf32>
    %cst_11 = arith.constant dense<0.000000e+00> : vector<15x128xf32>
    %30 = tpu.matmul %29, %28, %cst_11 {dimension_numbers = #tpu.dot_dimension_numbers<[1], [0], [0], [1], [0, 0, 1, 1], [], []>} : vector<15x15xf32>, vector<15x128xf32>, vector<15x128xf32> -> vector<15x128xf32>
    %c0_12 = arith.constant 0 : index
    %c0_13 = arith.constant 0 : index
    %31 = vector.load %arg7[%c0_12, %c0_13] : memref<15x1xf32, #tpu.memory_space<vmem>>, vector<15x1xf32>
    %32 = vector.broadcast %31 : vector<15x1xf32> to vector<15x128xf32>
    %33 = arith.addf %30, %32 : vector<15x128xf32>
    %34 = math.tanh %33 : vector<15x128xf32>
    %c0_14 = arith.constant 0 : index
    %c0_15 = arith.constant 0 : index
    %35 = vector.load %arg8[%c0_14, %c0_15] : memref<15x2xf32, #tpu.memory_space<vmem>>, vector<15x2xf32>
    %36 = vector.extract_strided_slice %35 {offsets = [0, 0], sizes = [15, 1], strides = [1, 1]} : vector<15x2xf32> to vector<15x1xf32>
    %37 = vector.broadcast %36 : vector<15x1xf32> to vector<15x128xf32>
    %38 = arith.mulf %37, %34 : vector<15x128xf32>
    %cst_16 = arith.constant dense<0.000000e+00> : vector<128xf32>
    %39 = vector.multi_reduction <add>, %38, %cst_16 [0] : vector<15x128xf32> to vector<128xf32>
    %40 = vector.shape_cast %39 : vector<128xf32> to vector<1x128xf32>
    %41 = vector.extract_strided_slice %35 {offsets = [0, 1], sizes = [15, 1], strides = [1, 1]} : vector<15x2xf32> to vector<15x1xf32>
    %42 = vector.broadcast %41 : vector<15x1xf32> to vector<15x128xf32>
    %43 = arith.mulf %42, %34 : vector<15x128xf32>
    %cst_17 = arith.constant dense<0.000000e+00> : vector<128xf32>
    %44 = vector.multi_reduction <add>, %43, %cst_17 [0] : vector<15x128xf32> to vector<128xf32>
    %45 = vector.shape_cast %44 : vector<128xf32> to vector<1x128xf32>
    %46 = tpu.concatenate %40, %45 in 0 : vector<1x128xf32>, vector<1x128xf32> -> vector<2x128xf32>
    %c0_18 = arith.constant 0 : index
    %c0_19 = arith.constant 0 : index
    %47 = vector.load %arg9[%c0_18, %c0_19] : memref<2x1xf32, #tpu.memory_space<vmem>>, vector<2x1xf32>
    %48 = vector.broadcast %47 : vector<2x1xf32> to vector<2x128xf32>
    %49 = arith.addf %46, %48 : vector<2x128xf32>
    %c0_20 = arith.constant 0 : index
    %c0_21 = arith.constant 0 : index
    %50 = vector.load %arg10[%c0_20, %c0_21] : memref<2x128xf32, #tpu.memory_space<vmem>>, vector<2x128xf32>
    tpu.vector_store %arg10[%c0_20, %c0_21], %49 {strides = array<i32>} : memref<2x128xf32, #tpu.memory_space<vmem>>, vector<2x128xf32>,
    return
  }
  func.func @transform_0(%arg0: i32) -> (i32, i32) {
    %c0_i32 = arith.constant 0 : i32
    %c0_i32_0 = arith.constant 0 : i32
    return %c0_i32, %arg0 : i32, i32
  }
  func.func @transform_1(%arg0: i32) -> (i32, i32) {
    %c0_i32 = arith.constant 0 : i32
    %c0_i32_0 = arith.constant 0 : i32
    %c0_i32_1 = arith.constant 0 : i32
    return %c0_i32, %c0_i32_0 : i32, i32
  }
  func.func @transform_2(%arg0: i32) -> (i32, i32) {
    %c0_i32 = arith.constant 0 : i32
    %c0_i32_0 = arith.constant 0 : i32
    %c0_i32_1 = arith.constant 0 : i32
    return %c0_i32, %c0_i32_0 : i32, i32
  }
  func.func @transform_3(%arg0: i32) -> (i32, i32) {
    %c0_i32 = arith.constant 0 : i32
    %c0_i32_0 = arith.constant 0 : i32
    %c0_i32_1 = arith.constant 0 : i32
    return %c0_i32, %c0_i32_0 : i32, i32
  }
  func.func @transform_4(%arg0: i32) -> (i32, i32) {
    %c0_i32 = arith.constant 0 : i32
    %c0_i32_0 = arith.constant 0 : i32
    %c0_i32_1 = arith.constant 0 : i32
    return %c0_i32, %c0_i32_0 : i32, i32
  }
  func.func @transform_5(%arg0: i32) -> (i32, i32) {
    %c0_i32 = arith.constant 0 : i32
    %c0_i32_0 = arith.constant 0 : i32
    %c0_i32_1 = arith.constant 0 : i32
    return %c0_i32, %c0_i32_0 : i32, i32
  }
  func.func @transform_6(%arg0: i32) -> (i32, i32) {
    %c0_i32 = arith.constant 0 : i32
    %c0_i32_0 = arith.constant 0 : i32
    %c0_i32_1 = arith.constant 0 : i32
    return %c0_i32, %c0_i32_0 : i32, i32
  }
  func.func @transform_7(%arg0: i32) -> (i32, i32) {
    %c0_i32 = arith.constant 0 : i32
    %c0_i32_0 = arith.constant 0 : i32
    %c0_i32_1 = arith.constant 0 : i32
    return %c0_i32, %c0_i32_0 : i32, i32
  }
  func.func @transform_8(%arg0: i32) -> (i32, i32) {
    %c0_i32 = arith.constant 0 : i32
    %c0_i32_0 = arith.constant 0 : i32
    %c0_i32_1 = arith.constant 0 : i32
    return %c0_i32, %c0_i32_0 : i32, i32
  }
  func.func @transform_9(%arg0: i32) -> (i32, i32) {
    %c0_i32 = arith.constant 0 : i32
    %c0_i32_0 = arith.constant 0 : i32
    return %c0_i32, %arg0 : i32, i32
  }
}

</mosaic_0001>

<llo_original>
// kernel: tpu_custom_call.1
$region0: #{tpu_custom_call.1}
  #allocation0 [shape = 'u32[]', space=smem, size = 0x4, offset = 0x4, fixed_abs, tag = 'smem constant byte address 0x4 - core index']
  #allocation1 [shape = 'u32[144,128]{1,0:T(1,128)}', space=vmem, size = 0x12000, scoped, tag = 'internal scratch']
  %s0 = inlined_call_operand.vmem [shape: f32[3,128], index: 0, kind: input, shape index: {}]
  %s1 = inlined_call_operand.vmem [shape: f32[15,3], index: 1, kind: input, shape index: {}]
  %s2 = inlined_call_operand.vmem [shape: f32[15,1], index: 2, kind: input, shape index: {}]
  %s3 = inlined_call_operand.vmem [shape: f32[15,15], index: 3, kind: input, shape index: {}]
  %s4 = inlined_call_operand.vmem [shape: f32[15,1], index: 4, kind: input, shape index: {}]
  %s5 = inlined_call_operand.vmem [shape: f32[15,15], index: 5, kind: input, shape index: {}]
  %s6 = inlined_call_operand.vmem [shape: f32[15,1], index: 6, kind: input, shape index: {}]
  %s7 = inlined_call_operand.vmem [shape: f32[15,2], index: 7, kind: input, shape index: {}]
  %s8 = inlined_call_operand.vmem [shape: f32[2,1], index: 8, kind: input, shape index: {}]
  %s9 = inlined_call_operand.hbm [shape: f32[2,128], index: 9, kind: output, shape index: {}]
  %s10 = sld [smem:[#allocation0]]
  $region46: #{tpu_custom_call.1} parent=0
    _
  %s12 = ssub.s32 1, %s10
  %s13 = scalar_select 0, %s12, %s10
  $region1: #{tpu_custom_call.1} parent=0
    #allocation2 [shape = 'u8[1024]{0}', space=vmem, size = 0x400, scoped, tag = 'output window, operand 0, single buffered']
    #allocation3 [shape = 's32[1]{0}', space=sflag, size = 0x4, scoped, tag = 'scoped memory for tpu_custom_call.1']
    %14 = vsyncpa [#allocation3], 0
    // Predicated region
    $region2: #{tpu_custom_call.1} parent=1 // pred_check
      _
    $region3: #{tpu_custom_call.1} parent=1 // pred_check_branch
      %16 = sbr.rel (0) target = $region5
    $region4: #{tpu_custom_call.1} parent=1 // pred_region
      _
    $region5: #{tpu_custom_call.1} parent=1 // pred_fallthru
      _
    // Predicated region
    $region6: #{tpu_custom_call.1} parent=1 // pred_check
      _
    $region7: #{tpu_custom_call.1} parent=1 // pred_check_branch
      %18 = sbr.rel (0) target = $region9
    $region8: #{tpu_custom_call.1} parent=1 // pred_region
      _
    $region9: #{tpu_custom_call.1} parent=1 // pred_fallthru
      _
    // Predicated region
    $region10: #{tpu_custom_call.1} parent=1 // pred_check
      _
    $region11: #{tpu_custom_call.1} parent=1 // pred_check_branch
      %20 = sbr.rel (0) target = $region13
    $region12: #{tpu_custom_call.1} parent=1 // pred_region
      _
    $region13: #{tpu_custom_call.1} parent=1 // pred_fallthru
      _
    // Predicated region
    $region14: #{tpu_custom_call.1} parent=1 // pred_check
      _
    $region15: #{tpu_custom_call.1} parent=1 // pred_check_branch
      %22 = sbr.rel (0) target = $region17
    $region16: #{tpu_custom_call.1} parent=1 // pred_region
      _
    $region17: #{tpu_custom_call.1} parent=1 // pred_fallthru
      _
    // Predicated region
    $region18: #{tpu_custom_call.1} parent=1 // pred_check
      _
    $region19: #{tpu_custom_call.1} parent=1 // pred_check_branch
      %24 = sbr.rel (0) target = $region21
    $region20: #{tpu_custom_call.1} parent=1 // pred_region
      _
    $region21: #{tpu_custom_call.1} parent=1 // pred_fallthru
      _
    // Predicated region
    $region22: #{tpu_custom_call.1} parent=1 // pred_check
      _
    $region23: #{tpu_custom_call.1} parent=1 // pred_check_branch
      %26 = sbr.rel (0) target = $region25
    $region24: #{tpu_custom_call.1} parent=1 // pred_region
      _
    $region25: #{tpu_custom_call.1} parent=1 // pred_fallthru
      _
    // Predicated region
    $region26: #{tpu_custom_call.1} parent=1 // pred_check
      _
    $region27: #{tpu_custom_call.1} parent=1 // pred_check_branch
      %28 = sbr.rel (0) target = $region29
    $region28: #{tpu_custom_call.1} parent=1 // pred_region
      _
    $region29: #{tpu_custom_call.1} parent=1 // pred_fallthru
      _
    // Predicated region
    $region30: #{tpu_custom_call.1} parent=1 // pred_check
      _
    $region31: #{tpu_custom_call.1} parent=1 // pred_check_branch
      %30 = sbr.rel (0) target = $region33
    $region32: #{tpu_custom_call.1} parent=1 // pred_region
      _
    $region33: #{tpu_custom_call.1} parent=1 // pred_fallthru
      _
    // Predicated region
    $region34: #{tpu_custom_call.1} parent=1 // pred_check
      _
    $region35: #{tpu_custom_call.1} parent=1 // pred_check_branch
      %32 = sbr.rel (0) target = $region37
    $region36: #{tpu_custom_call.1} parent=1 // pred_region
      _
    $region37: #{tpu_custom_call.1} parent=1 // pred_fallthru
      _
    %v33 = vld [vmem:[%s0] sm:$0x7]
    %v34 = vld [vmem:[%s1] sm:$0xff]
    %v35 = vld [vmem:[%s1 + $0x8] sm:$0x7f]
    %v36 = vld [vmem:[%s2] sm:$0xff]
    %v37 = vld [vmem:[%s2 + $0x8] sm:$0x7f]
    %39 = vset.pattern.permute.xlu0 0
    %40 = vperm.xlu0 %39, %v34
    %v41 = vpop.permute.xlu0 %40
    %44 = vset.pattern.permute.xlu0 0
    %45 = vperm.xlu0 %44, %v35
    %v46 = vpop.permute.xlu0 %45
    %v48 = vlaneseq
    %v49 = vshrl.u32 %v48, 7
    %v50 = vsub.s32 0, %v49
    %v51 = vrot.slane %v33, %v50
    %v52 = vmul.f32 %v41, %v51
    %v53 = vmul.f32 %v46, %v51
    %55 = vset.pattern.permute.xlu0 0
    %56 = vperm.xlu0 %55, %v36
    %v57 = vpop.permute.xlu0 %56
    %60 = vset.pattern.permute.xlu0 0
    %61 = vperm.xlu0 %60, %v37
    %v62 = vpop.permute.xlu0 %61
    %v64 = vadd.f32 %v57, %v52
    %v65 = vadd.f32 %v62, %v53
    %66 = vset.pattern.permute.xlu0 1
    %67 = vperm.xlu0 %66, %v34
    %v68 = vpop.permute.xlu0 %67
    %70 = vset.pattern.permute.xlu0 1
    %71 = vperm.xlu0 %70, %v35
    %v72 = vpop.permute.xlu0 %71
    %v74 = vlaneseq
    %v75 = vshrl.u32 %v74, 7
    %v76 = vsub.s32 1, %v75
    %v77 = vrot.slane %v33, %v76
    %v78 = vmul.f32 %v68, %v77
    %v79 = vmul.f32 %v72, %v77
    %v80 = vadd.f32 %v64, %v78
    %v81 = vadd.f32 %v65, %v79
    %82 = vset.pattern.permute.xlu0 2
    %83 = vperm.xlu0 %82, %v34
    %v84 = vpop.permute.xlu0 %83
    %86 = vset.pattern.permute.xlu0 2
    %87 = vperm.xlu0 %86, %v35
    %v88 = vpop.permute.xlu0 %87
    %v90 = vlaneseq
    %v91 = vshrl.u32 %v90, 7
    %v92 = vsub.s32 2, %v91
    %v93 = vrot.slane %v33, %v92
    %v94 = vmul.f32 %v84, %v93
    %v95 = vmul.f32 %v88, %v93
    %v96 = vadd.f32 %v80, %v94
    %v97 = vadd.f32 %v81, %v95
    %v98 = vtanh.pop %v96
    %v99 = vtanh.pop %v97
    %v100 = vld [vmem:[%s3] sm:$0xff]
    %v101 = vld [vmem:[%s3 + $0x8] sm:$0x7f]
    %v102 = vld [vmem:[%s4] sm:$0xff]
    %v103 = vld [vmem:[%s4 + $0x8] sm:$0x7f]
    %105 = vset.pattern.permute.xlu0 0
    %106 = vperm.xlu0 %105, %v102
    %v107 = vpop.permute.xlu0 %106
    %110 = vset.pattern.permute.xlu0 0
    %111 = vperm.xlu0 %110, %v103
    %v112 = vpop.permute.xlu0 %111
    %vm114 = vcmask 121856
    %v116 = vsel %vm114, %v100, 0
    %v119 = vsel %vm114, %v101, 0
    %vm121 = vcmask 1046528
    %v123 = vsel %vm121, %v99, 0
    %125 = vmatprep.subr.mxu0 0.0
    %126 = vmatpush1.msra.mxu0 %v98
    %127 = vmatprep.subr.mxu0 0.0
    %128 = vmatpush1.msra.mxu0 %v123
    %129 = vmatprep.subr.mxu0 0.0
    %130 = vmatpush1.msra.mxu0 0.0
    %131 = vmatprep.subr.mxu0 0.0
    %132 = vmatpush1.msra.mxu0 0.0
    %133 = vmatprep.subr.mxu0 0.0
    %134 = vmatpush1.msra.mxu0 0.0
    %135 = vmatprep.subr.mxu0 0.0
    %136 = vmatpush1.msra.mxu0 0.0
    %137 = vmatprep.subr.mxu0 0.0
    %138 = vmatpush1.msra.mxu0 0.0
    %139 = vmatprep.subr.mxu0 0.0
    %140 = vmatpush1.msra.mxu0 0.0
    %141 = vmatprep.subr.mxu0 0.0
    %142 = vmatpush1.msra.mxu0 0.0
    %143 = vmatprep.subr.mxu0 0.0
    %144 = vmatpush1.msra.mxu0 0.0
    %145 = vmatprep.subr.mxu0 0.0
    %146 = vmatpush1.msra.mxu0 0.0
    %147 = vmatprep.subr.mxu0 0.0
    %148 = vmatpush1.msra.mxu0 0.0
    %149 = vmatprep.subr.mxu0 0.0
    %150 = vmatpush1.msra.mxu0 0.0
    %151 = vmatprep.subr.mxu0 0.0
    %152 = vmatpush1.msra.mxu0 0.0
    %153 = vmatprep.subr.mxu0 0.0
    %154 = vmatpush1.msra.mxu0 0.0
    %155 = vmatprep.subr.mxu0 0.0
    %156 = vmatpush1.msra.mxu0 0.0
    %157 = vmatprep.subr.mxu0 0.0
    %158 = vmatpush1.msra.mxu0 0.0
    %159 = vmatprep.subr.mxu0 0.0
    %160 = vmatpush1.msra.mxu0 0.0
    %161 = vmatprep.subr.mxu0 0.0
    %162 = vmatpush1.msra.mxu0 0.0
    %163 = vmatprep.subr.mxu0 0.0
    %164 = vmatpush1.msra.mxu0 0.0
    %165 = vmatprep.subr.mxu0 0.0
    %166 = vmatpush1.msra.mxu0 0.0
    %167 = vmatprep.subr.mxu0 0.0
    %168 = vmatpush1.msra.mxu0 0.0
    %169 = vmatprep.subr.mxu0 0.0
    %170 = vmatpush1.msra.mxu0 0.0
    %171 = vmatprep.subr.mxu0 0.0
    %172 = vmatpush1.msra.mxu0 0.0
    %173 = vmatprep.subr.mxu0 0.0
    %174 = vmatpush1.msra.mxu0 0.0
    %175 = vmatprep.subr.mxu0 0.0
    %176 = vmatpush1.msra.mxu0 0.0
    %177 = vmatprep.subr.mxu0 0.0
    %178 = vmatpush1.msra.mxu0 0.0
    %179 = vmatprep.subr.mxu0 0.0
    %180 = vmatpush1.msra.mxu0 0.0
    %181 = vmatprep.subr.mxu0 0.0
    %182 = vmatpush1.msra.mxu0 0.0
    %183 = vmatprep.subr.mxu0 0.0
    %184 = vmatpush1.msra.mxu0 0.0
    %185 = vmatprep.subr.mxu0 0.0
    %186 = vmatpush1.msra.mxu0 0.0
    %187 = vmatprep.subr.mxu0 0.0
    %188 = vmatpush1.msra.mxu0 0.0
    %189 = vmatprep.mubr.f32.mxu0 0.0
    %190 = vmatmul.mubr.f32.gmra.mrb[0].mxu0 %v116
    %v191 = vpop.f32.mrb[0].mxu0
    %v192 = vadd.f32 %v107, %v191
    %v193 = vpop.f32.mrb[0].mxu0
    %194 = vmatprep.mubr.f32.mxu0 0.0
    %195 = vmatmul.mubr.f32.gmra.mrb[0].mxu0 %v119
    %v196 = vpop.f32.mrb[0].mxu0
    %v197 = vadd.f32 %v112, %v196
    %v198 = vpop.f32.mrb[0].mxu0
    %199 = vdwg.mxu0
    %v200 = vtanh.pop %v192
    %v201 = vtanh.pop %v197
    %v202 = vld [vmem:[%s5] sm:$0xff]
    %v203 = vld [vmem:[%s5 + $0x8] sm:$0x7f]
    %v204 = vld [vmem:[%s6] sm:$0xff]
    %v205 = vld [vmem:[%s6 + $0x8] sm:$0x7f]
    %207 = vset.pattern.permute.xlu0 0
    %208 = vperm.xlu0 %207, %v204
    %v209 = vpop.permute.xlu0 %208
    %212 = vset.pattern.permute.xlu0 0
    %213 = vperm.xlu0 %212, %v205
    %v214 = vpop.permute.xlu0 %213
    %v217 = vsel %vm114, %v202, 0
    %v220 = vsel %vm114, %v203, 0
    %v223 = vsel %vm121, %v201, 0
    %225 = vmatprep.subr.mxu0 0.0
    %226 = vmatpush1.msra.mxu0 %v200
    %227 = vmatprep.subr.mxu0 0.0
    %228 = vmatpush1.msra.mxu0 %v223
    %229 = vmatprep.subr.mxu0 0.0
    %230 = vmatpush1.msra.mxu0 0.0
    %231 = vmatprep.subr.mxu0 0.0
    %232 = vmatpush1.msra.mxu0 0.0
    %233 = vmatprep.subr.mxu0 0.0
    %234 = vmatpush1.msra.mxu0 0.0
    %235 = vmatprep.subr.mxu0 0.0
    %236 = vmatpush1.msra.mxu0 0.0
    %237 = vmatprep.subr.mxu0 0.0
    %238 = vmatpush1.msra.mxu0 0.0
    %239 = vmatprep.subr.mxu0 0.0
    %240 = vmatpush1.msra.mxu0 0.0
    %241 = vmatprep.subr.mxu0 0.0
    %242 = vmatpush1.msra.mxu0 0.0
    %243 = vmatprep.subr.mxu0 0.0
    %244 = vmatpush1.msra.mxu0 0.0
    %245 = vmatprep.subr.mxu0 0.0
    %246 = vmatpush1.msra.mxu0 0.0
    %247 = vmatprep.subr.mxu0 0.0
    %248 = vmatpush1.msra.mxu0 0.0
    %249 = vmatprep.subr.mxu0 0.0
    %250 = vmatpush1.msra.mxu0 0.0
    %251 = vmatprep.subr.mxu0 0.0
    %252 = vmatpush1.msra.mxu0 0.0
    %253 = vmatprep.subr.mxu0 0.0
    %254 = vmatpush1.msra.mxu0 0.0
    %255 = vmatprep.subr.mxu0 0.0
    %256 = vmatpush1.msra.mxu0 0.0
    %257 = vmatprep.subr.mxu0 0.0
    %258 = vmatpush1.msra.mxu0 0.0
    %259 = vmatprep.subr.mxu0 0.0
    %260 = vmatpush1.msra.mxu0 0.0
    %261 = vmatprep.subr.mxu0 0.0
    %262 = vmatpush1.msra.mxu0 0.0
    %263 = vmatprep.subr.mxu0 0.0
    %264 = vmatpush1.msra.mxu0 0.0
    %265 = vmatprep.subr.mxu0 0.0
    %266 = vmatpush1.msra.mxu0 0.0
    %267 = vmatprep.subr.mxu0 0.0
    %268 = vmatpush1.msra.mxu0 0.0
    %269 = vmatprep.subr.mxu0 0.0
    %270 = vmatpush1.msra.mxu0 0.0
    %271 = vmatprep.subr.mxu0 0.0
    %272 = vmatpush1.msra.mxu0 0.0
    %273 = vmatprep.subr.mxu0 0.0
    %274 = vmatpush1.msra.mxu0 0.0
    %275 = vmatprep.subr.mxu0 0.0
    %276 = vmatpush1.msra.mxu0 0.0
    %277 = vmatprep.subr.mxu0 0.0
    %278 = vmatpush1.msra.mxu0 0.0
    %279 = vmatprep.subr.mxu0 0.0
    %280 = vmatpush1.msra.mxu0 0.0
    %281 = vmatprep.subr.mxu0 0.0
    %282 = vmatpush1.msra.mxu0 0.0
    %283 = vmatprep.subr.mxu0 0.0
    %284 = vmatpush1.msra.mxu0 0.0
    %285 = vmatprep.subr.mxu0 0.0
    %286 = vmatpush1.msra.mxu0 0.0
    %287 = vmatprep.subr.mxu0 0.0
    %288 = vmatpush1.msra.mxu0 0.0
    %289 = vmatprep.mubr.f32.mxu0 0.0
    %290 = vmatmul.mubr.f32.gmra.mrb[0].mxu0 %v217
    %v291 = vpop.f32.mrb[0].mxu0
    %v292 = vadd.f32 %v209, %v291
    %v293 = vpop.f32.mrb[0].mxu0
    %294 = vmatprep.mubr.f32.mxu0 0.0
    %295 = vmatmul.mubr.f32.gmra.mrb[0].mxu0 %v220
    %v296 = vpop.f32.mrb[0].mxu0
    %v297 = vadd.f32 %v214, %v296
    %v298 = vpop.f32.mrb[0].mxu0
    %299 = vdwg.mxu0
    %v300 = vtanh.pop %v292
    %v301 = vtanh.pop %v297
    %v302 = vld [vmem:[%s7] sm:$0xff]
    %v303 = vld [vmem:[%s7 + $0x8] sm:$0x7f]
    %305 = vset.pattern.permute.xlu0 0
    %306 = vperm.xlu0 %305, %v302
    %v307 = vpop.permute.xlu0 %306
    %310 = vset.pattern.permute.xlu0 0
    %311 = vperm.xlu0 %310, %v303
    %v312 = vpop.permute.xlu0 %311
    %v314 = vmul.f32 %v307, %v300
    %v315 = vmul.f32 %v312, %v301
    %v316 = vsel %vm121, %v315, 0.0
    %v317 = vadd.f32 %v314, %v316
    %v318 = vrot.slane %v317, 4
    %v319 = vadd.f32 %v317, %v318
    %v320 = vrot.slane %v319, 2
    %v321 = vadd.f32 %v319, %v320
    %v322 = vrot.slane %v321, 1
    %v323 = vadd.f32 %v321, %v322
    %324 = vset.pattern.permute.xlu0 1
    %325 = vperm.xlu0 %324, %v302
    %v326 = vpop.permute.xlu0 %325
    %328 = vset.pattern.permute.xlu0 1
    %329 = vperm.xlu0 %328, %v303
    %v330 = vpop.permute.xlu0 %329
    %v332 = vmul.f32 %v326, %v300
    %v333 = vmul.f32 %v330, %v301
    %v334 = vsel %vm121, %v333, 0.0
    %v335 = vadd.f32 %v332, %v334
    %v336 = vrot.slane %v335, 4
    %v337 = vadd.f32 %v335, %v336
    %v338 = vrot.slane %v337, 2
    %v339 = vadd.f32 %v337, %v338
    %v340 = vrot.slane %v339, 1
    %v341 = vadd.f32 %v339, %v340
    %vm342 = vcmask 1040384
    %v343 = vsel %vm342, %v323, %v341
    %v344 = vld [vmem:[%s8] sm:$0x3]
    %346 = vset.pattern.permute.xlu0 0
    %347 = vperm.xlu0 %346, %v344
    %v348 = vpop.permute.xlu0 %347
    %v350 = vadd.f32 %v343, %v348
    %351 = vst [vmem:[#allocation2] sm:$0x3] %v350
    // Predicated region
    $region38: #{tpu_custom_call.1} parent=1 // pred_check
      _
    $region39: #{tpu_custom_call.1} parent=1 // pred_check_branch
      %353 = sbr.rel (0) target = $region41
    $region40: #{tpu_custom_call.1} parent=1 // pred_region
      %s355 = ssub.s32 32, 32
      %356 = vsyncadd [#allocation3], %s355
      %s358 = sshll.u32 [#allocation2], 4
      %s359 = int_to_ptr.vmem [resolvable:$true] %s358
      %361 = dma.vmem_to_hbm [thread:$0]  %s359, 32, %s9, [#allocation3]
    $region41: #{tpu_custom_call.1} parent=1 // pred_fallthru
      _
    // Predicated region
    $region42: #{tpu_custom_call.1} parent=1 // pred_check
      _
    $region43: #{tpu_custom_call.1} parent=1 // pred_check_branch
      %363 = sbr.rel (0) target = $region45
    $region44: #{tpu_custom_call.1} parent=1 // pred_region
      %364 = dma.done [#allocation3], 32
    $region45: #{tpu_custom_call.1} parent=1 // pred_fallthru
      _
    %365 = vsyncpa [#allocation3], 1

</llo_original>
